<compile_context>
chip_gen: v6e
topology: v6e:2x2x1
jax: 0.10.0
libtpu: 0.0.40
codegen_flags: <defaults>
</compile_context>

<pallas_src>
import functools

import numpy as np
import jax
import jax.numpy as jnp
from jax.experimental import pallas as pl
from jax.experimental.pallas import tpu as pltpu


# ----------------------------------------------------------------------------
# Helpers: per-generation VMEM budget and padded-footprint estimates.
# ----------------------------------------------------------------------------
def _round_up(x, m):
    return (x + m - 1) // m * m


def _vmem_capacity_bytes():
    try:
        return int(pltpu.get_tpu_info().vmem_capacity_bytes)
    except Exception:
        return 64 << 20  # conservative: v7x per-TensorCore VMEM


def _vmem_tile_bytes(shape, dtype):
    """VMEM footprint of a 2-D tile including (sublane, lane) padding."""
    itemsize = int(jnp.dtype(dtype).itemsize)
    sub_q = max(8, 32 // itemsize)          # 8 for f32, 16 for bf16
    sub = _round_up(int(shape[-2]), sub_q)
    lane = _round_up(int(shape[-1]), 128)
    lead = 1
    for d in shape[:-2]:
        lead *= int(d)
    return lead * sub * lane * itemsize


def _largest_divisor_tile(n_pad, candidates):
    for c in candidates:
        if c <= n_pad and n_pad % c == 0:
            return c
    return n_pad


def _grid_geometry(n, itemsize, capacity):
    """Pick (tn, tk, n_pad): lane-quantum padding keeps tiles large for any N
    and avoids ragged contraction tiles (which would read unspecified data)."""
    if n <= 512:
        n_pad = _round_up(n, 128)
    elif n <= 4096:
        n_pad = _round_up(n, 256)
    else:
        n_pad = _round_up(n, 512)
    tn = _largest_divisor_tile(n_pad, (512, 256, 128))
    tk = _largest_divisor_tile(n_pad, (2048, 1024, 512, 256, 128))
    # Keep the (double-buffered) L tile pair within ~30% of the VMEM budget.
    while tk > 128 and 2 * tn * tk * itemsize > 0.30 * capacity:
        tk //= 2
    return tn, tk, n_pad


# ----------------------------------------------------------------------------
# Fully fused two-layer kernel (small N, everything resident in VMEM).
# Transposed layout:  out^T = W2^T @ relu( (W1^T X^T + b1) L ) @ ... all (C, N).
# ----------------------------------------------------------------------------
def _hypergcn_fused_kernel(l_ref, xt_ref, w1t_ref, b1_ref, w2t_ref, b2_ref, o_ref):
    L = l_ref[...]
    xw1t = jnp.dot(w1t_ref[...], xt_ref[...],
                   preferred_element_type=jnp.float32) + b1_ref[...]
    ht = jnp.maximum(
        jnp.dot(xw1t.astype(L.dtype), L, preferred_element_type=jnp.float32), 0.0)
    xw2t = jnp.dot(w2t_ref[...], ht,
                   preferred_element_type=jnp.float32) + b2_ref[...]
    o_ref[...] = jnp.dot(xw2t.astype(L.dtype), L,
                         preferred_element_type=jnp.float32).astype(o_ref.dtype)


def _fused_vmem_estimate(n, c_in, c_hid, c_out, l_dtype):
    f32 = jnp.float32
    return (2 * _vmem_tile_bytes((n, n), l_dtype)        # L (pipeline buffers)
            + 2 * _vmem_tile_bytes((c_in, n), f32)       # X^T
            + _vmem_tile_bytes((c_hid, c_in), f32)
            + _vmem_tile_bytes((c_hid, 1), f32)
            + _vmem_tile_bytes((c_out, c_hid), f32)
            + _vmem_tile_bytes((c_out, 1), f32)
            + 2 * _vmem_tile_bytes((c_out, n), f32)      # output
            + 2 * _vmem_tile_bytes((c_hid, n), f32)      # xw1^T + h^T temporaries
            + _vmem_tile_bytes((c_out, n), f32))         # xw2^T temporary


def _fused_call(L_op, Xt, W1t, b1c, W2t, b2c, capacity):
    C_hid, C_in = W1t.shape
    C_out = W2t.shape[0]
    N = L_op.shape[0]
    l_item = int(jnp.dtype(L_op.dtype).itemsize)

    flops = 2 * N * (C_in * C_hid + N * C_hid + C_hid * C_out + N * C_out)
    bytes_accessed = (N * N * l_item
                      + 4 * (C_in * N + C_in * C_hid + C_hid
                             + C_hid * C_out + C_out + C_out * N))

    est = _fused_vmem_estimate(N, C_in, C_hid, C_out, L_op.dtype)
    cp_kwargs = dict(dimension_semantics=("arbitrary",))
    if est > 12 * (1 << 20):
        cp_kwargs["vmem_limit_bytes"] = int(0.75 * capacity)

    return pl.pallas_call(
        _hypergcn_fused_kernel,
        out_shape=jax.ShapeDtypeStruct((C_out, N), jnp.float32),
        grid=(1,),
        in_specs=[
            pl.BlockSpec((N, N), lambda i: (0, 0)),          # L (symmetric)
            pl.BlockSpec((C_in, N), lambda i: (0, 0)),       # X^T (lane-dense)
            pl.BlockSpec((C_hid, C_in), lambda i: (0, 0)),   # W1^T
            pl.BlockSpec((C_hid, 1), lambda i: (0, 0)),      # b1 (column)
            pl.BlockSpec((C_out, C_hid), lambda i: (0, 0)),  # W2^T
            pl.BlockSpec((C_out, 1), lambda i: (0, 0)),      # b2 (column)
        ],
        out_specs=pl.BlockSpec((C_out, N), lambda i: (0, 0)),
        compiler_params=pltpu.CompilerParams(**cp_kwargs),
        cost_estimate=pl.CostEstimate(flops=int(flops), transcendentals=0,
                                      bytes_accessed=int(bytes_accessed)),
    )(L_op, Xt, W1t, b1c, W2t, b2c)


# ----------------------------------------------------------------------------
# Tiled per-layer kernel: fused linear + K-tiled GCN smoothing.
#   out^T[:, n_tile] = sum_k (W^T X^T[:, k_tile] + b) @ L[k_tile, n_tile]
# Accumulated in an f32 VMEM scratch; ReLU applied at finalize for layer 1.
# ----------------------------------------------------------------------------
def _smooth_layer_kernel(wt_ref, b_ref, xt_ref, l_ref, o_ref, acc_ref, *, apply_relu):
    k = pl.program_id(1)

    @pl.when(k == 0)
    def _():
        acc_ref[...] = jnp.zeros_like(acc_ref)

    xwt = jnp.dot(wt_ref[...], xt_ref[...],
                  preferred_element_type=jnp.float32) + b_ref[...]
    acc_ref[...] += jnp.dot(xwt.astype(l_ref.dtype), l_ref[...],
                            preferred_element_type=jnp.float32)

    @pl.when(k == pl.num_programs(1) - 1)
    def _():
        out = acc_ref[...]
        if apply_relu:
            out = jnp.maximum(out, 0.0)
        o_ref[...] = out.astype(o_ref.dtype)


def _smooth_layer(L_pad, Xt_pad, Wt, b_col, *, apply_relu, tn, tk, capacity):
    C_out, C_in = Wt.shape
    n_pad = L_pad.shape[0]
    l_item = int(jnp.dtype(L_pad.dtype).itemsize)
    grid = (n_pad // tn, n_pad // tk)

    flops = 2 * n_pad * n_pad * C_out + 2 * grid[0] * n_pad * C_in * C_out
    bytes_accessed = (n_pad * n_pad * l_item
                      + grid[0] * C_in * n_pad * 4
                      + C_out * n_pad * 4 + C_in * C_out * 4 + C_out * 4)

    est = (2 * _vmem_tile_bytes((tk, tn), L_pad.dtype)
           + 2 * _vmem_tile_bytes((C_in, tk), Xt_pad.dtype)
           + _vmem_tile_bytes((C_out, C_in), Wt.dtype)
           + _vmem_tile_bytes((C_out, 1), b_col.dtype)
           + 3 * _vmem_tile_bytes((C_out, tn), jnp.float32))   # out (x2) + acc

    cp_kwargs = dict(dimension_semantics=("parallel", "arbitrary"))
    if est > 12 * (1 << 20):
        cp_kwargs["vmem_limit_bytes"] = int(0.75 * capacity)

    kernel = functools.partial(_smooth_layer_kernel, apply_relu=apply_relu)
    return pl.pallas_call(
        kernel,
        out_shape=jax.ShapeDtypeStruct((C_out, n_pad), jnp.float32),
        grid=grid,
        in_specs=[
            pl.BlockSpec((C_out, C_in), lambda n, k: (0, 0)),  # W^T
            pl.BlockSpec((C_out, 1), lambda n, k: (0, 0)),     # b column
            pl.BlockSpec((C_in, tk), lambda n, k: (0, k)),     # X^T k-slice
            pl.BlockSpec((tk, tn), lambda n, k: (k, n)),       # L tile
        ],
        out_specs=pl.BlockSpec((C_out, tn), lambda n, k: (0, n)),
        scratch_shapes=[pltpu.VMEM((C_out, tn), jnp.float32)],
        compiler_params=pltpu.CompilerParams(**cp_kwargs),
        cost_estimate=pl.CostEstimate(flops=int(flops), transcendentals=0,
                                      bytes_accessed=int(bytes_accessed)),
    )(Wt, b_col, Xt_pad, L_pad)


# ----------------------------------------------------------------------------
# Forward: two HyperGCNConv layers (use_mediator=False, use_bn=False, fast=True,
# eval mode -> dropout is identity).  L must be the (symmetric) cached GCN
# Laplacian of the HyperGCN-collapsed graph.
# ----------------------------------------------------------------------------
def hypergcn_forward(X, L, params, *, use_bf16=False, force_tiled=False):
    N, C_in = X.shape
    (W1, b1), (W2, b2) = params
    C_hid, C_out = W1.shape[1], W2.shape[1]
    capacity = _vmem_capacity_bytes()

    L_op = L.astype(jnp.bfloat16) if use_bf16 else L
    # Layout plumbing only (XLA side): lane-dense transposed activations.
    Xt = X.T
    W1t, W2t = W1.T, W2.T
    b1c, b2c = b1.reshape(-1, 1), b2.reshape(-1, 1)

    fused_est = _fused_vmem_estimate(N, C_in, C_hid, C_out, L_op.dtype)
    # Fused single-step path only for small problems; larger N goes tiled so the
    # "parallel" n axis can shard across v7x's two TensorCores.
    if (not force_tiled) and N <= 2048 and fused_est <= 0.4 * capacity:
        Yt = _fused_call(L_op, Xt, W1t, b1c, W2t, b2c, capacity)
    else:
        l_item = int(jnp.dtype(L_op.dtype).itemsize)
        tn, tk, n_pad = _grid_geometry(N, l_item, capacity)
        pad = n_pad - N
        L_pad = jnp.pad(L_op, ((0, pad), (0, pad))) if pad else L_op
        Xt_pad = jnp.pad(Xt, ((0, 0), (0, pad))) if pad else Xt
        Ht = _smooth_layer(L_pad, Xt_pad, W1t, b1c, apply_relu=True,
                           tn=tn, tk=tk, capacity=capacity)
        Yt_pad = _smooth_layer(L_pad, Ht, W2t, b2c, apply_relu=False,
                               tn=tn, tk=tk, capacity=capacity)
        Yt = Yt_pad[:, :N] if pad else Yt_pad
    return Yt.T  # back to (N, num_classes)


# ----------------------------------------------------------------------------
# Glue: Graph.from_hypergraph_hypergcn (no mediator) + GCN Laplacian.
# Each hyperedge collapses to the edge (argmax, argmin) under a random feature
# projection; A_hat = A + I; L = D^-1/2 A_hat D^-1/2 (symmetric).
# ----------------------------------------------------------------------------
def build_hypergcn_laplacian(X_np, hyperedges, rv_np):
    N = X_np.shape[0]
    scores = (X_np @ rv_np).squeeze(-1)
    A = np.zeros((N, N), dtype=np.float32)
    for e in hyperedges:
        e = list(e)
        s = scores[e]
        u = e[int(np.argmax(s))]
        v = e[int(np.argmin(s))]
        if u != v:
            A[u, v] = 1.0
            A[v, u] = 1.0
    A_hat = A + np.eye(N, dtype=np.float32)
    d_inv_sqrt = 1.0 / np.sqrt(A_hat.sum(axis=1))
    return (d_inv_sqrt[:, None] * A_hat * d_inv_sqrt[None, :]).astype(np.float32)


def make_hyperedges(key, num_edges, n):
    eks = jax.random.split(key, num_edges)
    edges = []
    for i in range(num_edges):
        ka, kb = jax.random.split(eks[i])
        sz = int(jax.random.randint(ka, (), 2, 7))
        verts = np.unique(np.asarray(jax.random.randint(kb, (sz,), 0, n)))
        if verts.shape[0] < 2:
            verts = np.unique(np.concatenate([verts, (verts + 1) % n]))
        edges.append(verts.tolist())
    return edges


def init_linear(key, c_in, c_out):
    # PyTorch nn.Linear default init: U(-1/sqrt(fan_in), 1/sqrt(fan_in))
    kw, kb = jax.random.split(key)
    bound = 1.0 / np.sqrt(c_in)
    W = jax.random.uniform(kw, (c_in, c_out), jnp.float32, -bound, bound)
    b = jax.random.uniform(kb, (c_out,), jnp.float32, -bound, bound)
    return W, b


if __name__ == "__main__":
    N, C_IN, C_HID, N_CLASSES = 64, 16, 32, 8
    NUM_EDGES = 24

    key = jax.random.PRNGKey(0)
    k_x, k_rv, k_e, k_l1, k_l2, k_x2, k_e2 = jax.random.split(key, 7)

    X = jax.random.normal(k_x, (N, C_IN), jnp.float32)
    hyperedges = make_hyperedges(k_e, NUM_EDGES, N)
    rv = np.asarray(jax.random.uniform(k_rv, (C_IN, 1), jnp.float32))
    # fast=True: cached graph built once from the INPUT features X.
    L = jnp.asarray(build_hypergcn_laplacian(np.asarray(X), hyperedges, rv))

    params = (init_linear(k_l1, C_IN, C_HID), init_linear(k_l2, C_HID, N_CLASSES))

    def reference(X_, L_):
        (W1, b1), (W2, b2) = params
        H = jnp.maximum(L_ @ (X_ @ W1 + b1), 0.0)
        return L_ @ (H @ W2 + b2)

    # Fused single-call path (default at this size), tiled path, bf16-L path.
    Y_fused = jax.block_until_ready(hypergcn_forward(X, L, params))
    Y_tiled = jax.block_until_ready(hypergcn_forward(X, L, params, force_tiled=True))
    Y_bf16 = jax.block_until_ready(hypergcn_forward(X, L, params, use_bf16=True))

    Y_ref = reference(X, L)
    np.testing.assert_allclose(np.asarray(Y_fused), np.asarray(Y_ref),
                               rtol=1e-5, atol=1e-5)
    np.testing.assert_allclose(np.asarray(Y_tiled), np.asarray(Y_ref),
                               rtol=1e-5, atol=1e-5)
    np.testing.assert_allclose(np.asarray(Y_bf16), np.asarray(Y_ref),
                               rtol=5e-2, atol=5e-2)

    # Slightly larger problem to exercise the multi-tile K-accumulation path
    # (n_pad=384 -> grid (3, 3) with tn=tk=128).
    N2, NUM_EDGES2 = 300, 120
    X2 = jax.random.normal(k_x2, (N2, C_IN), jnp.float32)
    hyperedges2 = make_hyperedges(k_e2, NUM_EDGES2, N2)
    L2 = jnp.asarray(build_hypergcn_laplacian(np.asarray(X2), hyperedges2, rv))
    Y2_tiled = jax.block_until_ready(hypergcn_forward(X2, L2, params, force_tiled=True))
    Y2_ref = reference(X2, L2)
    np.testing.assert_allclose(np.asarray(Y2_tiled), np.asarray(Y2_ref),
                               rtol=1e-5, atol=2e-5)

    assert Y_fused.shape == (N, N_CLASSES) and Y_fused.dtype == jnp.float32
    assert Y2_tiled.shape == (N2, N_CLASSES)
    print("KERNEL_OK")
</pallas_src>

<mosaic_0001>
module attributes {stable_mosaic.version = 11 : i64} {
  func.func @_hypergcn_fused_kernel(%arg0: i32, %arg1: memref<64x64xf32, #tpu.memory_space<vmem>>, %arg2: memref<16x64xf32, #tpu.memory_space<vmem>>, %arg3: memref<32x16xf32, #tpu.memory_space<vmem>>, %arg4: memref<32x1xf32, #tpu.memory_space<vmem>>, %arg5: memref<8x32xf32, #tpu.memory_space<vmem>>, %arg6: memref<8x1xf32, #tpu.memory_space<vmem>>, %arg7: memref<8x64xf32, #tpu.memory_space<vmem>>) attributes {dimension_semantics = [#tpu.dimension_semantics<arbitrary>], iteration_bounds = array<i64: 1>, scalar_prefetch = 0 : i64, scratch_operands = 0 : i64, tpu.core_type = #tpu.core_type<tc>, window_params = [{pipeline_mode = #tpu.pipeline_mode<synchronous>, transform_indices = @transform_0, window_bounds = array<i64: 64, 64>}, {pipeline_mode = #tpu.pipeline_mode<synchronous>, transform_indices = @transform_1, window_bounds = array<i64: 16, 64>}, {pipeline_mode = #tpu.pipeline_mode<synchronous>, transform_indices = @transform_2, window_bounds = array<i64: 32, 16>}, {pipeline_mode = #tpu.pipeline_mode<synchronous>, transform_indices = @transform_3, window_bounds = array<i64: 32, 1>}, {pipeline_mode = #tpu.pipeline_mode<synchronous>, transform_indices = @transform_4, window_bounds = array<i64: 8, 32>}, {pipeline_mode = #tpu.pipeline_mode<synchronous>, transform_indices = @transform_5, window_bounds = array<i64: 8, 1>}, {pipeline_mode = #tpu.pipeline_mode<synchronous>, transform_indices = @transform_6, window_bounds = array<i64: 8, 64>}]} {
    %c0 = arith.constant 0 : index
    %c0_0 = arith.constant 0 : index
    %0 = vector.load %arg1[%c0, %c0_0] : memref<64x64xf32, #tpu.memory_space<vmem>>, vector<64x64xf32>
    %c0_1 = arith.constant 0 : index
    %c0_2 = arith.constant 0 : index
    %1 = vector.load %arg3[%c0_1, %c0_2] : memref<32x16xf32, #tpu.memory_space<vmem>>, vector<32x16xf32>
    %c0_3 = arith.constant 0 : index
    %c0_4 = arith.constant 0 : index
    %2 = vector.load %arg2[%c0_3, %c0_4] : memref<16x64xf32, #tpu.memory_space<vmem>>, vector<16x64xf32>
    %cst = arith.constant dense<0.000000e+00> : vector<32x64xf32>
    %3 = tpu.matmul %1, %2, %cst {dimension_numbers = #tpu.dot_dimension_numbers<[1], [0], [0], [1], [0, 0, 1, 1], [], []>} : vector<32x16xf32>, vector<16x64xf32>, vector<32x64xf32> -> vector<32x64xf32>
    %c0_5 = arith.constant 0 : index
    %c0_6 = arith.constant 0 : index
    %4 = vector.load %arg4[%c0_5, %c0_6] : memref<32x1xf32, #tpu.memory_space<vmem>>, vector<32x1xf32>
    %5 = vector.broadcast %4 : vector<32x1xf32> to vector<32x64xf32>
    %6 = arith.addf %3, %5 : vector<32x64xf32>
    %cst_7 = arith.constant dense<0.000000e+00> : vector<32x64xf32>
    %7 = tpu.matmul %6, %0, %cst_7 {dimension_numbers = #tpu.dot_dimension_numbers<[1], [0], [0], [1], [0, 0, 1, 1], [], []>} : vector<32x64xf32>, vector<64x64xf32>, vector<32x64xf32> -> vector<32x64xf32>
    %cst_8 = arith.constant 0.000000e+00 : f32
    %8 = vector.broadcast %cst_8 : f32 to vector<32x64xf32>
    %9 = arith.maximumf %7, %8 : vector<32x64xf32>
    %c0_9 = arith.constant 0 : index
    %c0_10 = arith.constant 0 : index
    %10 = vector.load %arg5[%c0_9, %c0_10] : memref<8x32xf32, #tpu.memory_space<vmem>>, vector<8x32xf32>
    %cst_11 = arith.constant dense<0.000000e+00> : vector<8x64xf32>
    %11 = tpu.matmul %10, %9, %cst_11 {dimension_numbers = #tpu.dot_dimension_numbers<[1], [0], [0], [1], [0, 0, 1, 1], [], []>} : vector<8x32xf32>, vector<32x64xf32>, vector<8x64xf32> -> vector<8x64xf32>
    %c0_12 = arith.constant 0 : index
    %c0_13 = arith.constant 0 : index
    %12 = vector.load %arg6[%c0_12, %c0_13] : memref<8x1xf32, #tpu.memory_space<vmem>>, vector<8x1xf32>
    %13 = vector.broadcast %12 : vector<8x1xf32> to vector<8x64xf32>
    %14 = arith.addf %11, %13 : vector<8x64xf32>
    %cst_14 = arith.constant dense<0.000000e+00> : vector<8x64xf32>
    %15 = tpu.matmul %14, %0, %cst_14 {dimension_numbers = #tpu.dot_dimension_numbers<[1], [0], [0], [1], [0, 0, 1, 1], [], []>} : vector<8x64xf32>, vector<64x64xf32>, vector<8x64xf32> -> vector<8x64xf32>
    %c0_15 = arith.constant 0 : index
    %c0_16 = arith.constant 0 : index
    %16 = vector.load %arg7[%c0_15, %c0_16] : memref<8x64xf32, #tpu.memory_space<vmem>>, vector<8x64xf32>
    tpu.vector_store %arg7[%c0_15, %c0_16], %15 {strides = array<i32>} : memref<8x64xf32, #tpu.memory_space<vmem>>, vector<8x64xf32>,
    return
  }
  func.func @transform_0(%arg0: i32) -> (i32, i32) {
    %c0_i32 = arith.constant 0 : i32
    %c0_i32_0 = arith.constant 0 : i32
    %c0_i32_1 = arith.constant 0 : i32
    return %c0_i32, %c0_i32_0 : i32, i32
  }
  func.func @transform_1(%arg0: i32) -> (i32, i32) {
    %c0_i32 = arith.constant 0 : i32
    %c0_i32_0 = arith.constant 0 : i32
    %c0_i32_1 = arith.constant 0 : i32
    return %c0_i32, %c0_i32_0 : i32, i32
  }
  func.func @transform_2(%arg0: i32) -> (i32, i32) {
    %c0_i32 = arith.constant 0 : i32
    %c0_i32_0 = arith.constant 0 : i32
    %c0_i32_1 = arith.constant 0 : i32
    return %c0_i32, %c0_i32_0 : i32, i32
  }
  func.func @transform_3(%arg0: i32) -> (i32, i32) {
    %c0_i32 = arith.constant 0 : i32
    %c0_i32_0 = arith.constant 0 : i32
    %c0_i32_1 = arith.constant 0 : i32
    return %c0_i32, %c0_i32_0 : i32, i32
  }
  func.func @transform_4(%arg0: i32) -> (i32, i32) {
    %c0_i32 = arith.constant 0 : i32
    %c0_i32_0 = arith.constant 0 : i32
    %c0_i32_1 = arith.constant 0 : i32
    return %c0_i32, %c0_i32_0 : i32, i32
  }
  func.func @transform_5(%arg0: i32) -> (i32, i32) {
    %c0_i32 = arith.constant 0 : i32
    %c0_i32_0 = arith.constant 0 : i32
    %c0_i32_1 = arith.constant 0 : i32
    return %c0_i32, %c0_i32_0 : i32, i32
  }
  func.func @transform_6(%arg0: i32) -> (i32, i32) {
    %c0_i32 = arith.constant 0 : i32
    %c0_i32_0 = arith.constant 0 : i32
    %c0_i32_1 = arith.constant 0 : i32
    return %c0_i32, %c0_i32_0 : i32, i32
  }
}

</mosaic_0001>

<llo_original>
// kernel: tpu_custom_call.1
$region0: #{tpu_custom_call.1}
  #allocation0 [shape = 'u32[]', space=smem, size = 0x4, offset = 0x4, fixed_abs, tag = 'smem constant byte address 0x4 - core index']
  #allocation1 [shape = 'u32[144,128]{1,0:T(1,128)}', space=vmem, size = 0x12000, scoped, tag = 'internal scratch']
  %s0 = inlined_call_operand.vmem [shape: f32[64,64], index: 0, kind: input, shape index: {}]
  %s1 = inlined_call_operand.vmem [shape: f32[16,64], index: 1, kind: input, shape index: {}]
  %s2 = inlined_call_operand.vmem [shape: f32[32,16], index: 2, kind: input, shape index: {}]
  %s3 = inlined_call_operand.vmem [shape: f32[32,1], index: 3, kind: input, shape index: {}]
  %s4 = inlined_call_operand.vmem [shape: f32[8,32], index: 4, kind: input, shape index: {}]
  %s5 = inlined_call_operand.vmem [shape: f32[8,1], index: 5, kind: input, shape index: {}]
  %s6 = inlined_call_operand.hbm [shape: f32[8,64], index: 6, kind: output, shape index: {}]
  %s7 = sld [smem:[#allocation0]]
  $region34: #{tpu_custom_call.1} parent=0
    _
  %s9 = ssub.s32 1, %s7
  %s10 = scalar_select 0, %s9, %s7
  $region1: #{tpu_custom_call.1} parent=0
    #allocation2 [shape = 'u8[4096]{0}', space=vmem, size = 0x1000, scoped, tag = 'output window, operand 0, single buffered']
    #allocation3 [shape = 's32[1]{0}', space=sflag, size = 0x4, scoped, tag = 'scoped memory for tpu_custom_call.1']
    %11 = vsyncpa [#allocation3], 0
    // Predicated region
    $region2: #{tpu_custom_call.1} parent=1 // pred_check
      _
    $region3: #{tpu_custom_call.1} parent=1 // pred_check_branch
      %13 = sbr.rel (0) target = $region5
    $region4: #{tpu_custom_call.1} parent=1 // pred_region
      _
    $region5: #{tpu_custom_call.1} parent=1 // pred_fallthru
      _
    // Predicated region
    $region6: #{tpu_custom_call.1} parent=1 // pred_check
      _
    $region7: #{tpu_custom_call.1} parent=1 // pred_check_branch
      %15 = sbr.rel (0) target = $region9
    $region8: #{tpu_custom_call.1} parent=1 // pred_region
      _
    $region9: #{tpu_custom_call.1} parent=1 // pred_fallthru
      _
    // Predicated region
    $region10: #{tpu_custom_call.1} parent=1 // pred_check
      _
    $region11: #{tpu_custom_call.1} parent=1 // pred_check_branch
      %17 = sbr.rel (0) target = $region13
    $region12: #{tpu_custom_call.1} parent=1 // pred_region
      _
    $region13: #{tpu_custom_call.1} parent=1 // pred_fallthru
      _
    // Predicated region
    $region14: #{tpu_custom_call.1} parent=1 // pred_check
      _
    $region15: #{tpu_custom_call.1} parent=1 // pred_check_branch
      %19 = sbr.rel (0) target = $region17
    $region16: #{tpu_custom_call.1} parent=1 // pred_region
      _
    $region17: #{tpu_custom_call.1} parent=1 // pred_fallthru
      _
    // Predicated region
    $region18: #{tpu_custom_call.1} parent=1 // pred_check
      _
    $region19: #{tpu_custom_call.1} parent=1 // pred_check_branch
      %21 = sbr.rel (0) target = $region21
    $region20: #{tpu_custom_call.1} parent=1 // pred_region
      _
    $region21: #{tpu_custom_call.1} parent=1 // pred_fallthru
      _
    // Predicated region
    $region22: #{tpu_custom_call.1} parent=1 // pred_check
      _
    $region23: #{tpu_custom_call.1} parent=1 // pred_check_branch
      %23 = sbr.rel (0) target = $region25
    $region24: #{tpu_custom_call.1} parent=1 // pred_region
      _
    $region25: #{tpu_custom_call.1} parent=1 // pred_fallthru
      _
    %v24 = vld [vmem:[%s0] sm:$0xff]
    %v25 = vld [vmem:[%s0 + $0x8] sm:$0xff]
    %v26 = vld [vmem:[%s0 + $0x10] sm:$0xff]
    %v27 = vld [vmem:[%s0 + $0x18] sm:$0xff]
    %v28 = vld [vmem:[%s0 + $0x20] sm:$0xff]
    %v29 = vld [vmem:[%s0 + $0x28] sm:$0xff]
    %v30 = vld [vmem:[%s0 + $0x30] sm:$0xff]
    %v31 = vld [vmem:[%s0 + $0x38] sm:$0xff]
    %v32 = vld [vmem:[%s2] sm:$0xff]
    %v33 = vld [vmem:[%s2 + $0x8] sm:$0xff]
    %v34 = vld [vmem:[%s2 + $0x10] sm:$0xff]
    %v35 = vld [vmem:[%s2 + $0x18] sm:$0xff]
    %v36 = vld [vmem:[%s1] sm:$0xff]
    %v37 = vld [vmem:[%s1 + $0x8] sm:$0xff]
    %v38 = vld [vmem:[%s3] sm:$0xff]
    %v39 = vld [vmem:[%s3 + $0x8] sm:$0xff]
    %v40 = vld [vmem:[%s3 + $0x10] sm:$0xff]
    %v41 = vld [vmem:[%s3 + $0x18] sm:$0xff]
    %43 = vset.pattern.permute.xlu0 0
    %44 = vperm.xlu0 %43, %v38
    %v45 = vpop.permute.xlu0 %44
    %48 = vset.pattern.permute.xlu0 0
    %49 = vperm.xlu0 %48, %v39
    %v50 = vpop.permute.xlu0 %49
    %53 = vset.pattern.permute.xlu0 0
    %54 = vperm.xlu0 %53, %v40
    %v55 = vpop.permute.xlu0 %54
    %58 = vset.pattern.permute.xlu0 0
    %59 = vperm.xlu0 %58, %v41
    %v60 = vpop.permute.xlu0 %59
    %vm62 = vcmask 130048
    %v64 = vsel %vm62, %v32, 0
    %v67 = vsel %vm62, %v33, 0
    %v70 = vsel %vm62, %v34, 0
    %v73 = vsel %vm62, %v35, 0
    %75 = vmatprep.subr.mxu0 0.0
    %76 = vmatpush1.msra.mxu0 0.0
    %77 = vmatprep.subr.mxu0 0.0
    %78 = vmatpush1.msra.mxu0 0.0
    %79 = vmatprep.subr.mxu0 0.0
    %80 = vmatpush1.msra.mxu0 0.0
    %81 = vmatprep.subr.mxu0 0.0
    %82 = vmatpush1.msra.mxu0 0.0
    %83 = vmatprep.subr.mxu0 0.0
    %84 = vmatpush1.msra.mxu0 0.0
    %85 = vmatprep.subr.mxu0 0.0
    %86 = vmatpush1.msra.mxu0 0.0
    %87 = vmatprep.subr.mxu0 0.0
    %88 = vmatpush1.msra.mxu0 0.0
    %89 = vmatprep.subr.mxu0 0.0
    %90 = vmatpush1.msra.mxu0 0.0
    %91 = vmatprep.subr.mxu0 0.0
    %92 = vmatpush1.msra.mxu0 0.0
    %93 = vmatprep.subr.mxu0 0.0
    %94 = vmatpush1.msra.mxu0 0.0
    %95 = vmatprep.subr.mxu0 0.0
    %96 = vmatpush1.msra.mxu0 0.0
    %97 = vmatprep.subr.mxu0 0.0
    %98 = vmatpush1.msra.mxu0 0.0
    %99 = vmatprep.subr.mxu0 0.0
    %100 = vmatpush1.msra.mxu0 0.0
    %101 = vmatprep.subr.mxu0 0.0
    %102 = vmatpush1.msra.mxu0 0.0
    %103 = vmatprep.subr.mxu0 0.0
    %104 = vmatpush1.msra.mxu0 %v37
    %105 = vmatprep.subr.mxu0 0.0
    %106 = vmatpush1.msra.mxu0 %v36
    %107 = vmatprep.subr.mxu0 0.0
    %108 = vmatpush2.msra.mxu0 0.0
    %109 = vmatprep.subr.mxu0 0.0
    %110 = vmatpush2.msra.mxu0 0.0
    %111 = vmatprep.subr.mxu0 0.0
    %112 = vmatpush2.msra.mxu0 0.0
    %113 = vmatprep.subr.mxu0 0.0
    %114 = vmatpush2.msra.mxu0 0.0
    %115 = vmatprep.subr.mxu0 0.0
    %116 = vmatpush2.msra.mxu0 0.0
    %117 = vmatprep.subr.mxu0 0.0
    %118 = vmatpush2.msra.mxu0 0.0
    %119 = vmatprep.subr.mxu0 0.0
    %120 = vmatpush2.msra.mxu0 0.0
    %121 = vmatprep.subr.mxu0 0.0
    %122 = vmatpush2.msra.mxu0 0.0
    %123 = vmatprep.subr.mxu0 0.0
    %124 = vmatpush2.msra.mxu0 0.0
    %125 = vmatprep.subr.mxu0 0.0
    %126 = vmatpush2.msra.mxu0 0.0
    %127 = vmatprep.subr.mxu0 0.0
    %128 = vmatpush2.msra.mxu0 0.0
    %129 = vmatprep.subr.mxu0 0.0
    %130 = vmatpush2.msra.mxu0 0.0
    %131 = vmatprep.subr.mxu0 0.0
    %132 = vmatpush2.msra.mxu0 0.0
    %133 = vmatprep.subr.mxu0 0.0
    %134 = vmatpush2.msra.mxu0 0.0
    %135 = vmatprep.subr.mxu0 0.0
    %136 = vmatpush2.msra.mxu0 0.0
    %137 = vmatprep.subr.mxu0 0.0
    %138 = vmatpush2.msra.mxu0 0.0
    %139 = vmatprep.mubr.f32.mxu0 0.0
    %140 = vmatmul.mubr.f32.gmra.mxu0 %v64
    %v141 = vpop.f32.mrf.mxu0
    %v142 = vadd.f32 %v45, %v141
    %v143 = vpop.f32.mrf.mxu0
    %144 = vmatprep.mubr.f32.mxu0 0.0
    %145 = vmatmul.mubr.f32.gmra.mxu0 %v67
    %v146 = vpop.f32.mrf.mxu0
    %v147 = vadd.f32 %v50, %v146
    %v148 = vpop.f32.mrf.mxu0
    %149 = vmatprep.mubr.f32.mxu0 0.0
    %150 = vmatmul.mubr.f32.gmra.mxu0 %v70
    %v151 = vpop.f32.mrf.mxu0
    %v152 = vadd.f32 %v55, %v151
    %v153 = vpop.f32.mrf.mxu0
    %154 = vmatprep.mubr.f32.mxu0 0.0
    %155 = vmatmul.mubr.f32.gmra.mxu0 %v73
    %v156 = vpop.f32.mrf.mxu0
    %v157 = vadd.f32 %v60, %v156
    %v158 = vpop.f32.mrf.mxu0
    %159 = vdwg.mxu0
    %vm160 = vcmask 523264
    %v162 = vsel %vm160, %v142, 0
    %v165 = vsel %vm160, %v147, 0
    %v168 = vsel %vm160, %v152, 0
    %v171 = vsel %vm160, %v157, 0
    %173 = vmatprep.subr.mxu0 0.0
    %174 = vmatpush1.msra.mxu0 0.0
    %175 = vmatprep.subr.mxu0 0.0
    %176 = vmatpush1.msra.mxu0 0.0
    %177 = vmatprep.subr.mxu0 0.0
    %178 = vmatpush1.msra.mxu0 0.0
    %179 = vmatprep.subr.mxu0 0.0
    %180 = vmatpush1.msra.mxu0 0.0
    %181 = vmatprep.subr.mxu0 0.0
    %182 = vmatpush1.msra.mxu0 0.0
    %183 = vmatprep.subr.mxu0 0.0
    %184 = vmatpush1.msra.mxu0 0.0
    %185 = vmatprep.subr.mxu0 0.0
    %186 = vmatpush1.msra.mxu0 0.0
    %187 = vmatprep.subr.mxu0 0.0
    %188 = vmatpush1.msra.mxu0 0.0
    %189 = vmatprep.subr.mxu0 0.0
    %190 = vmatpush1.msra.mxu0 %v31
    %191 = vmatprep.subr.mxu0 0.0
    %192 = vmatpush1.msra.mxu0 %v30
    %193 = vmatprep.subr.mxu0 0.0
    %194 = vmatpush1.msra.mxu0 %v29
    %195 = vmatprep.subr.mxu0 0.0
    %196 = vmatpush1.msra.mxu0 %v28
    %197 = vmatprep.subr.mxu0 0.0
    %198 = vmatpush1.msra.mxu0 %v27
    %199 = vmatprep.subr.mxu0 0.0
    %200 = vmatpush1.msra.mxu0 %v26
    %201 = vmatprep.subr.mxu0 0.0
    %202 = vmatpush1.msra.mxu0 %v25
    %203 = vmatprep.subr.mxu0 0.0
    %204 = vmatpush1.msra.mxu0 %v24
    %205 = vmatprep.subr.mxu0 0.0
    %206 = vmatpush2.msra.mxu0 0.0
    %207 = vmatprep.subr.mxu0 0.0
    %208 = vmatpush2.msra.mxu0 0.0
    %209 = vmatprep.subr.mxu0 0.0
    %210 = vmatpush2.msra.mxu0 0.0
    %211 = vmatprep.subr.mxu0 0.0
    %212 = vmatpush2.msra.mxu0 0.0
    %213 = vmatprep.subr.mxu0 0.0
    %214 = vmatpush2.msra.mxu0 0.0
    %215 = vmatprep.subr.mxu0 0.0
    %216 = vmatpush2.msra.mxu0 0.0
    %217 = vmatprep.subr.mxu0 0.0
    %218 = vmatpush2.msra.mxu0 0.0
    %219 = vmatprep.subr.mxu0 0.0
    %220 = vmatpush2.msra.mxu0 0.0
    %221 = vmatprep.subr.mxu0 0.0
    %222 = vmatpush2.msra.mxu0 0.0
    %223 = vmatprep.subr.mxu0 0.0
    %224 = vmatpush2.msra.mxu0 0.0
    %225 = vmatprep.subr.mxu0 0.0
    %226 = vmatpush2.msra.mxu0 0.0
    %227 = vmatprep.subr.mxu0 0.0
    %228 = vmatpush2.msra.mxu0 0.0
    %229 = vmatprep.subr.mxu0 0.0
    %230 = vmatpush2.msra.mxu0 0.0
    %231 = vmatprep.subr.mxu0 0.0
    %232 = vmatpush2.msra.mxu0 0.0
    %233 = vmatprep.subr.mxu0 0.0
    %234 = vmatpush2.msra.mxu0 0.0
    %235 = vmatprep.subr.mxu0 0.0
    %236 = vmatpush2.msra.mxu0 0.0
    %237 = vmatprep.mubr.f32.mxu0 0.0
    %238 = vmatmul.mubr.f32.gmra.mxu0 %v162
    %v239 = vpop.f32.mrf.mxu0
    %v240 = vadd.f32 0.0, %v239
    %v241 = vpop.f32.mrf.mxu0
    %242 = vmatprep.mubr.f32.mxu0 0.0
    %243 = vmatmul.mubr.f32.gmra.mxu0 %v165
    %v244 = vpop.f32.mrf.mxu0
    %v245 = vadd.f32 0.0, %v244
    %v246 = vpop.f32.mrf.mxu0
    %247 = vmatprep.mubr.f32.mxu0 0.0
    %248 = vmatmul.mubr.f32.gmra.mxu0 %v168
    %v249 = vpop.f32.mrf.mxu0
    %v250 = vadd.f32 0.0, %v249
    %v251 = vpop.f32.mrf.mxu0
    %252 = vmatprep.mubr.f32.mxu0 0.0
    %253 = vmatmul.mubr.f32.gmra.mxu0 %v171
    %v254 = vpop.f32.mrf.mxu0
    %v255 = vadd.f32 0.0, %v254
    %v256 = vpop.f32.mrf.mxu0
    %257 = vdwg.mxu0
    %v258 = vmax.f32 %v240, 0.0
    %v259 = vmax.f32 %v245, 0.0
    %v260 = vmax.f32 %v250, 0.0
    %v261 = vmax.f32 %v255, 0.0
    %v262 = vld [vmem:[%s4] sm:$0xff]
    %v263 = vld [vmem:[%s5] sm:$0xff]
    %265 = vset.pattern.permute.xlu0 0
    %266 = vperm.xlu0 %265, %v263
    %v267 = vpop.permute.xlu0 %266
    %vm269 = vcmask 261120
    %v271 = vsel %vm269, %v262, 0
    %273 = vmatprep.subr.mxu0 0.0
    %274 = vmatpush1.msra.mxu0 0.0
    %275 = vmatprep.subr.mxu0 0.0
    %276 = vmatpush1.msra.mxu0 0.0
    %277 = vmatprep.subr.mxu0 0.0
    %278 = vmatpush1.msra.mxu0 0.0
    %279 = vmatprep.subr.mxu0 0.0
    %280 = vmatpush1.msra.mxu0 0.0
    %281 = vmatprep.subr.mxu0 0.0
    %282 = vmatpush1.msra.mxu0 0.0
    %283 = vmatprep.subr.mxu0 0.0
    %284 = vmatpush1.msra.mxu0 0.0
    %285 = vmatprep.subr.mxu0 0.0
    %286 = vmatpush1.msra.mxu0 0.0
    %287 = vmatprep.subr.mxu0 0.0
    %288 = vmatpush1.msra.mxu0 0.0
    %289 = vmatprep.subr.mxu0 0.0
    %290 = vmatpush1.msra.mxu0 0.0
    %291 = vmatprep.subr.mxu0 0.0
    %292 = vmatpush1.msra.mxu0 0.0
    %293 = vmatprep.subr.mxu0 0.0
    %294 = vmatpush1.msra.mxu0 0.0
    %295 = vmatprep.subr.mxu0 0.0
    %296 = vmatpush1.msra.mxu0 0.0
    %297 = vmatprep.subr.mxu0 0.0
    %298 = vmatpush1.msra.mxu0 %v261
    %299 = vmatprep.subr.mxu0 0.0
    %300 = vmatpush1.msra.mxu0 %v260
    %301 = vmatprep.subr.mxu0 0.0
    %302 = vmatpush1.msra.mxu0 %v259
    %303 = vmatprep.subr.mxu0 0.0
    %304 = vmatpush1.msra.mxu0 %v258
    %305 = vmatprep.subr.mxu0 0.0
    %306 = vmatpush2.msra.mxu0 0.0
    %307 = vmatprep.subr.mxu0 0.0
    %308 = vmatpush2.msra.mxu0 0.0
    %309 = vmatprep.subr.mxu0 0.0
    %310 = vmatpush2.msra.mxu0 0.0
    %311 = vmatprep.subr.mxu0 0.0
    %312 = vmatpush2.msra.mxu0 0.0
    %313 = vmatprep.subr.mxu0 0.0
    %314 = vmatpush2.msra.mxu0 0.0
    %315 = vmatprep.subr.mxu0 0.0
    %316 = vmatpush2.msra.mxu0 0.0
    %317 = vmatprep.subr.mxu0 0.0
    %318 = vmatpush2.msra.mxu0 0.0
    %319 = vmatprep.subr.mxu0 0.0
    %320 = vmatpush2.msra.mxu0 0.0
    %321 = vmatprep.subr.mxu0 0.0
    %322 = vmatpush2.msra.mxu0 0.0
    %323 = vmatprep.subr.mxu0 0.0
    %324 = vmatpush2.msra.mxu0 0.0
    %325 = vmatprep.subr.mxu0 0.0
    %326 = vmatpush2.msra.mxu0 0.0
    %327 = vmatprep.subr.mxu0 0.0
    %328 = vmatpush2.msra.mxu0 0.0
    %329 = vmatprep.subr.mxu0 0.0
    %330 = vmatpush2.msra.mxu0 0.0
    %331 = vmatprep.subr.mxu0 0.0
    %332 = vmatpush2.msra.mxu0 0.0
    %333 = vmatprep.subr.mxu0 0.0
    %334 = vmatpush2.msra.mxu0 0.0
    %335 = vmatprep.subr.mxu0 0.0
    %336 = vmatpush2.msra.mxu0 0.0
    %337 = vmatprep.mubr.f32.mxu0 0.0
    %338 = vmatmul.mubr.f32.gmra.mxu0 %v271
    %v339 = vpop.f32.mrf.mxu0
    %v340 = vadd.f32 %v267, %v339
    %v341 = vpop.f32.mrf.mxu0
    %342 = vdwg.mxu0
    %v344 = vsel %vm160, %v340, 0
    %346 = vmatprep.subr.mxu0 0.0
    %347 = vmatpush1.msra.mxu0 0.0
    %348 = vmatprep.subr.mxu0 0.0
    %349 = vmatpush1.msra.mxu0 0.0
    %350 = vmatprep.subr.mxu0 0.0
    %351 = vmatpush1.msra.mxu0 0.0
    %352 = vmatprep.subr.mxu0 0.0
    %353 = vmatpush1.msra.mxu0 0.0
    %354 = vmatprep.subr.mxu0 0.0
    %355 = vmatpush1.msra.mxu0 0.0
    %356 = vmatprep.subr.mxu0 0.0
    %357 = vmatpush1.msra.mxu0 0.0
    %358 = vmatprep.subr.mxu0 0.0
    %359 = vmatpush1.msra.mxu0 0.0
    %360 = vmatprep.subr.mxu0 0.0
    %361 = vmatpush1.msra.mxu0 0.0
    %362 = vmatprep.subr.mxu0 0.0
    %363 = vmatpush1.msra.mxu0 %v31
    %364 = vmatprep.subr.mxu0 0.0
    %365 = vmatpush1.msra.mxu0 %v30
    %366 = vmatprep.subr.mxu0 0.0
    %367 = vmatpush1.msra.mxu0 %v29
    %368 = vmatprep.subr.mxu0 0.0
    %369 = vmatpush1.msra.mxu0 %v28
    %370 = vmatprep.subr.mxu0 0.0
    %371 = vmatpush1.msra.mxu0 %v27
    %372 = vmatprep.subr.mxu0 0.0
    %373 = vmatpush1.msra.mxu0 %v26
    %374 = vmatprep.subr.mxu0 0.0
    %375 = vmatpush1.msra.mxu0 %v25
    %376 = vmatprep.subr.mxu0 0.0
    %377 = vmatpush1.msra.mxu0 %v24
    %378 = vmatprep.subr.mxu0 0.0
    %379 = vmatpush2.msra.mxu0 0.0
    %380 = vmatprep.subr.mxu0 0.0
    %381 = vmatpush2.msra.mxu0 0.0
    %382 = vmatprep.subr.mxu0 0.0
    %383 = vmatpush2.msra.mxu0 0.0
    %384 = vmatprep.subr.mxu0 0.0
    %385 = vmatpush2.msra.mxu0 0.0
    %386 = vmatprep.subr.mxu0 0.0
    %387 = vmatpush2.msra.mxu0 0.0
    %388 = vmatprep.subr.mxu0 0.0
    %389 = vmatpush2.msra.mxu0 0.0
    %390 = vmatprep.subr.mxu0 0.0
    %391 = vmatpush2.msra.mxu0 0.0
    %392 = vmatprep.subr.mxu0 0.0
    %393 = vmatpush2.msra.mxu0 0.0
    %394 = vmatprep.subr.mxu0 0.0
    %395 = vmatpush2.msra.mxu0 0.0
    %396 = vmatprep.subr.mxu0 0.0
    %397 = vmatpush2.msra.mxu0 0.0
    %398 = vmatprep.subr.mxu0 0.0
    %399 = vmatpush2.msra.mxu0 0.0
    %400 = vmatprep.subr.mxu0 0.0
    %401 = vmatpush2.msra.mxu0 0.0
    %402 = vmatprep.subr.mxu0 0.0
    %403 = vmatpush2.msra.mxu0 0.0
    %404 = vmatprep.subr.mxu0 0.0
    %405 = vmatpush2.msra.mxu0 0.0
    %406 = vmatprep.subr.mxu0 0.0
    %407 = vmatpush2.msra.mxu0 0.0
    %408 = vmatprep.subr.mxu0 0.0
    %409 = vmatpush2.msra.mxu0 0.0
    %410 = vmatprep.mubr.f32.mxu0 0.0
    %411 = vmatmul.mubr.f32.gmra.mxu0 %v344
    %v412 = vpop.f32.mrf.mxu0
    %v413 = vadd.f32 0.0, %v412
    %v414 = vpop.f32.mrf.mxu0
    %415 = vdwg.mxu0
    %416 = vst.msk [vmem:[#allocation2] sm:$0xff] %vm160, %v413
    // Predicated region
    $region26: #{tpu_custom_call.1} parent=1 // pred_check
      _
    $region27: #{tpu_custom_call.1} parent=1 // pred_check_branch
      %418 = sbr.rel (0) target = $region29
    $region28: #{tpu_custom_call.1} parent=1 // pred_region
      %s420 = ssub.s32 128, 128
      %421 = vsyncadd [#allocation3], %s420
      %s423 = sshll.u32 [#allocation2], 4
      %s424 = int_to_ptr.vmem [resolvable:$true] %s423
      %426 = dma.vmem_to_hbm [thread:$0]  %s424, 128, %s6, [#allocation3]
    $region29: #{tpu_custom_call.1} parent=1 // pred_fallthru
      _
    // Predicated region
    $region30: #{tpu_custom_call.1} parent=1 // pred_check
      _
    $region31: #{tpu_custom_call.1} parent=1 // pred_check_branch
      %428 = sbr.rel (0) target = $region33
    $region32: #{tpu_custom_call.1} parent=1 // pred_region
      %429 = dma.done [#allocation3], 128
    $region33: #{tpu_custom_call.1} parent=1 // pred_fallthru
      _
    %430 = vsyncpa [#allocation3], 1

</llo_original>
